<compile_context>
chip_gen: v5e
topology: v5e:2x2
jax: 0.10.0
libtpu: 0.0.40
codegen_flags: <defaults>
</compile_context>

<pallas_src>
import functools

import jax
import jax.numpy as jnp
from jax.experimental import pallas as pl
from jax.experimental.pallas import tpu as pltpu

EPS = 1e-5


def rmsnorm_kernel(x_ref, w_ref, o_ref, *, inv_h, eps):
    # x_ref: (ROW_TILE, H), w_ref: (1, H), o_ref: (ROW_TILE, H)
    xf = x_ref[...].astype(jnp.float32)                      # x.float()
    ms = jnp.sum(xf * xf, axis=-1, keepdims=True) * inv_h    # pow(2).mean(-1)
    inv = jax.lax.rsqrt(ms + eps)                            # rsqrt(... + eps) (EUP)
    normed = (xf * inv).astype(x_ref.dtype)                  # .type_as(x)
    # weight * normed in the promoted (output) dtype, exactly as torch does.
    o_ref[...] = w_ref[...].astype(o_ref.dtype) * normed.astype(o_ref.dtype)


def _round_up(v, m):
    return ((v + m - 1) // m) * m


def _vmem_capacity_bytes():
    try:
        return int(pltpu.get_tpu_info().vmem_capacity_bytes)
    except Exception:  # pragma: no cover - conservative fallback (v7x: 64 MiB/TC)
        return 64 << 20


def _pick_row_tile(h, in_dtype, out_dtype, n_rows, vmem_cap):
    """Largest row tile whose double-buffered in/out tiles + f32 temps fit VMEM."""
    h_lanes = _round_up(h, 128)  # physical lane footprint of one row
    per_row = h_lanes * (
        2 * jnp.dtype(in_dtype).itemsize      # double-buffered input tile
        + 2 * jnp.dtype(out_dtype).itemsize   # double-buffered output tile
        + 2 * 4                               # in-kernel f32 temporaries
    )
    budget = vmem_cap // 3
    tile = 2048
    while tile > 8 and tile * per_row > budget:
        tile //= 2
    # Grid-step floor: keep >=4 steps on v7x (2 TCs share the grid via the
    # "parallel" axis); single-TC v5e/v6e only need ~2 steps for pipelining.
    min_steps = 4 if vmem_cap <= (64 << 20) else 2
    max_useful = max(8, _round_up(pl.cdiv(max(1, n_rows), min_steps), 8))
    return max(8, min(tile, max_useful))


def rmsnorm(x, weight, *, eps=EPS, row_tile=None):
    """x: [..., H], weight: [H]. Returns promote(x.dtype, weight.dtype) array."""
    orig_shape = x.shape
    h = orig_shape[-1]
    out_dtype = jnp.promote_types(x.dtype, weight.dtype)

    x2d = x.reshape(-1, h)
    n_rows = x2d.shape[0]
    w2d = weight.reshape(1, h)

    vmem_cap = _vmem_capacity_bytes()
    if row_tile is None:
        row_tile = _pick_row_tile(h, x.dtype, out_dtype, n_rows, vmem_cap)

    # No host-side padding: Pallas pads reads / masks writes of the partial
    # final row block; the hidden dim block equals the full array dim.
    grid = (pl.cdiv(n_rows, row_tile),)

    # VMEM budget: double-buffered in/out tiles + f32 temporaries + weight +
    # slack; floored at 32 MiB, capped at ~72% of physical VMEM (v7x-safe).
    h_lanes = _round_up(h, 128)
    in_tile_bytes = row_tile * h_lanes * jnp.dtype(x.dtype).itemsize
    out_tile_bytes = row_tile * h_lanes * jnp.dtype(out_dtype).itemsize
    f32_tmp_bytes = 2 * row_tile * h_lanes * 4
    vmem_needed = 2 * in_tile_bytes + 2 * out_tile_bytes + f32_tmp_bytes \
        + h_lanes * 4 + (2 << 20)
    vmem_limit = int(min(max(vmem_needed + (4 << 20), 32 << 20),
                         int(vmem_cap * 0.72)))

    out = pl.pallas_call(
        functools.partial(rmsnorm_kernel, inv_h=1.0 / h, eps=eps),
        out_shape=jax.ShapeDtypeStruct((n_rows, h), out_dtype),
        grid_spec=pltpu.PrefetchScalarGridSpec(
            num_scalar_prefetch=0,
            grid=grid,
            in_specs=[
                pl.BlockSpec((row_tile, h), lambda i: (i, 0)),
                pl.BlockSpec((1, h), lambda i: (0, 0)),
            ],
            out_specs=pl.BlockSpec((row_tile, h), lambda i: (i, 0)),
        ),
        compiler_params=pltpu.CompilerParams(
            dimension_semantics=("parallel",),
            vmem_limit_bytes=vmem_limit,
        ),
    )(x2d, w2d)

    return out.reshape(orig_shape)


def rmsnorm_ref(x, weight, eps=EPS):
    xf = x.astype(jnp.float32)
    inv = jax.lax.rsqrt(jnp.mean(xf * xf, axis=-1, keepdims=True) + eps)
    normed = (xf * inv).astype(x.dtype)
    out_dtype = jnp.promote_types(x.dtype, weight.dtype)
    return weight.astype(out_dtype) * normed.astype(out_dtype)


if __name__ == "__main__":
    key = jax.random.PRNGKey(0)
    batch, seq, hidden = 2, 8, 32
    x = jax.random.normal(key, (batch, seq, hidden), dtype=jnp.float32)
    # nn.Parameter(torch.ones(dim)) -> deterministic ones
    weight = jnp.ones((hidden,), dtype=jnp.float32)

    y = rmsnorm(x, weight)
    jax.block_until_ready(y)

    y_ref = rmsnorm_ref(x, weight)
    assert y.shape == x.shape, (y.shape, x.shape)
    assert y.dtype == jnp.promote_types(x.dtype, weight.dtype)
    assert jnp.allclose(y, y_ref, atol=1e-5, rtol=1e-5)

    # Exercise the partial-final-block path: non-divisible row count (15 rows)
    # and a hidden dim that is not a multiple of 128 (96) -- no host padding.
    x2 = jax.random.normal(jax.random.PRNGKey(0), (3, 5, 96), dtype=jnp.float32)
    w2 = jnp.ones((96,), dtype=jnp.float32)
    y2 = rmsnorm(x2, w2)
    jax.block_until_ready(y2)
    assert jnp.allclose(y2, rmsnorm_ref(x2, w2), atol=1e-5, rtol=1e-5)

    print("KERNEL_OK")
</pallas_src>

<mosaic_0001>
module attributes {stable_mosaic.version = 11 : i64} {
  func.func @rmsnorm_kernel(%arg0: i32, %arg1: memref<8x32xf32, #tpu.memory_space<vmem>>, %arg2: memref<1x32xf32, #tpu.memory_space<vmem>>, %arg3: memref<8x32xf32, #tpu.memory_space<vmem>>) attributes {dimension_semantics = [#tpu.dimension_semantics<parallel>], iteration_bounds = array<i64: 2>, scalar_prefetch = 0 : i64, scratch_operands = 0 : i64, tpu.core_type = #tpu.core_type<tc>, window_params = [{transform_indices = @transform_0, window_bounds = array<i64: 8, 32>}, {pipeline_mode = #tpu.pipeline_mode<synchronous>, transform_indices = @transform_1, window_bounds = array<i64: 1, 32>}, {transform_indices = @transform_2, window_bounds = array<i64: 8, 32>}]} {
    %c0 = arith.constant 0 : index
    %c0_0 = arith.constant 0 : index
    %0 = vector.load %arg1[%c0, %c0_0] : memref<8x32xf32, #tpu.memory_space<vmem>>, vector<8x32xf32>
    %1 = arith.mulf %0, %0 : vector<8x32xf32>
    %cst = arith.constant dense<0.000000e+00> : vector<8xf32>
    %2 = vector.multi_reduction <add>, %1, %cst [1] : vector<8x32xf32> to vector<8xf32>
    %3 = vector.shape_cast %2 : vector<8xf32> to vector<8x1xf32>
    %cst_1 = arith.constant 3.125000e-02 : f32
    %4 = vector.broadcast %cst_1 : f32 to vector<8x1xf32>
    %5 = arith.mulf %3, %4 : vector<8x1xf32>
    %cst_2 = arith.constant 9.99999974E-6 : f32
    %6 = vector.broadcast %cst_2 : f32 to vector<8x1xf32>
    %7 = arith.addf %5, %6 : vector<8x1xf32>
    %8 = math.rsqrt %7 : vector<8x1xf32>
    %9 = vector.broadcast %8 : vector<8x1xf32> to vector<8x32xf32>
    %10 = arith.mulf %0, %9 : vector<8x32xf32>
    %c0_3 = arith.constant 0 : index
    %c0_4 = arith.constant 0 : index
    %11 = vector.load %arg2[%c0_3, %c0_4] : memref<1x32xf32, #tpu.memory_space<vmem>>, vector<1x32xf32>
    %12 = vector.broadcast %11 : vector<1x32xf32> to vector<8x32xf32>
    %13 = arith.mulf %12, %10 : vector<8x32xf32>
    %c0_5 = arith.constant 0 : index
    %c0_6 = arith.constant 0 : index
    %14 = vector.load %arg3[%c0_5, %c0_6] : memref<8x32xf32, #tpu.memory_space<vmem>>, vector<8x32xf32>
    tpu.vector_store %arg3[%c0_5, %c0_6], %13 {strides = array<i32>} : memref<8x32xf32, #tpu.memory_space<vmem>>, vector<8x32xf32>,
    return
  }
  func.func @transform_0(%arg0: i32) -> (i32, i32) {
    %c0_i32 = arith.constant 0 : i32
    %c0_i32_0 = arith.constant 0 : i32
    return %arg0, %c0_i32 : i32, i32
  }
  func.func @transform_1(%arg0: i32) -> (i32, i32) {
    %c0_i32 = arith.constant 0 : i32
    %c0_i32_0 = arith.constant 0 : i32
    %c0_i32_1 = arith.constant 0 : i32
    return %c0_i32, %c0_i32_0 : i32, i32
  }
  func.func @transform_2(%arg0: i32) -> (i32, i32) {
    %c0_i32 = arith.constant 0 : i32
    %c0_i32_0 = arith.constant 0 : i32
    return %arg0, %c0_i32 : i32, i32
  }
}

</mosaic_0001>

<llo_original>
// kernel: tpu_custom_call.1
$region0: #{tpu_custom_call.1}
  #allocation0 [shape = 'u32[]', space=smem, size = 0x4, offset = 0x4, fixed_abs, tag = 'smem constant byte address 0x4 - core index']
  #allocation1 [shape = 'u32[72,128]{1,0:T(1,128)}', space=vmem, size = 0x9000, scoped, tag = 'internal scratch']
  %s0 = inlined_call_operand.hbm [shape: f32[16,32], index: 0, kind: input, shape index: {}]
  %s1 = inlined_call_operand.hbm [shape: f32[1,32], index: 1, kind: input, shape index: {}]
  %s2 = inlined_call_operand.hbm [shape: f32[16,32], index: 2, kind: output, shape index: {}]
  %s3 = sld [smem:[#allocation0]]
  $region49: #{tpu_custom_call.1} parent=0
    _
  %s5 = ssub.s32 1, %s3
  %s6 = scalar_select 0, %s5, %s3
  $region1: #{tpu_custom_call.1} parent=0
    #allocation2 [shape = 'u8[8192]{0}', space=vmem, size = 0x2000, scoped, tag = 'input window, operand 0']
    #allocation3 [shape = 's32[2]{0}', space=sflag, size = 0x8, scoped, tag = 'scoped memory for tpu_custom_call.1']
    #allocation4 [shape = 's32[2]{0}', space=sflag, size = 0x8, scoped, tag = 'scoped memory for tpu_custom_call.1']
    #allocation5 [shape = 'u8[512]{0}', space=vmem, size = 0x400, scoped, tag = 'input window, operand 1, single buffered']
    #allocation6 [shape = 's32[1]{0}', space=sflag, size = 0x4, scoped, tag = 'scoped memory for tpu_custom_call.1']
    #allocation7 [shape = 'u8[8192]{0}', space=vmem, size = 0x2000, scoped, tag = 'output window, operand 0']
    %7 = vsyncpa [#allocation3], 0
    %s8 = scalar_lea.sflag [#allocation3], 1
    %9 = vsyncpa %s8, 0
    %10 = vsyncpa [#allocation6], 0
    %11 = vsyncpa [#allocation4], 0
    %s12 = scalar_lea.sflag [#allocation4], 1
    %13 = vsyncpa %s12, 0
    loop: start=0, step=1, limit=4
    $region2: #{tpu_custom_call.1} parent=1 // loop_pre_header
      _
    $region3: #{tpu_custom_call.1} parent=1 // loop_header
      %s15 = sphi 0, %s19
      %p16 = scmp.ge.s32.totalorder %s15, 4
      %s25 = sphi 0, %s27
      %s28 = sphi 0, %s25
      %s29 = sphi 0, %s28
      %s45 = sphi 0, %s29
      %s49 = sphi 0, %s49
      %s51 = sphi 0, %s49
      %s52 = sphi 0, %s51
      %s66 = sphi 0, %s52
      %s72 = sphi 0, %s74
      %s75 = sphi 0, %s72
      %s76 = sphi 0, %s75
      %s92 = sphi 0, %s76
    $region4: #{tpu_custom_call.1} parent=1 // loop_header_branch
      %18 = sbr.rel (%p16) target = $region8
    $region5: #{tpu_custom_call.1} parent=1 // loop_body
      %s20 = ssub.s32 %s15, 1
      %s21 = ssub.s32 %s15, 2
      %s22 = sadd.s32 %s15, 1
      %s23 = ssub.s32 %s15, %s22
      %p24 = scmp.eq.s32.totalorder %s23, 0
      %s26 = sadd.s32 %s25, 1
      %s27 = scalar_select %p24, %s25, %s26
      %p30 = pneg %p24
      %p31 = scmp.eq.s32.totalorder %s15, 1
      %p32 = por %p30, %p31
      %p33 = scmp.ne.s32.totalorder %s25, %s28
      %p34 = scmp.eq.s32.totalorder %s15, 0
      %p35 = por %p33, %p34
      %p36 = scmp.ne.s32.totalorder %s25, %s28
      %p37 = scmp.eq.s32.totalorder %s20, 1
      %p38 = por %p36, %p37
      %p39 = scmp.ne.s32.totalorder %s28, %s29
      %p40 = scmp.eq.s32.totalorder %s20, 0
      %p41 = por %p39, %p40
      %p42 = scmp.ne.s32.totalorder %s28, %s29
      %p43 = scmp.eq.s32.totalorder %s21, 1
      %p44 = por %p42, %p43
      %p46 = scmp.ne.s32.totalorder %s29, %s45
      %p47 = scmp.eq.s32.totalorder %s21, 0
      %p48 = por %p46, %p47
      %s50 = sadd.s32 %s49, 1
      %p53 = scmp.eq.s32.totalorder %s15, 1
      %p54 = scmp.ne.s32.totalorder %s49, %s51
      %p55 = scmp.eq.s32.totalorder %s15, 0
      %p56 = por %p54, %p55
      %p57 = scmp.ne.s32.totalorder %s49, %s51
      %p58 = scmp.eq.s32.totalorder %s20, 1
      %p59 = por %p57, %p58
      %p60 = scmp.ne.s32.totalorder %s51, %s52
      %p61 = scmp.eq.s32.totalorder %s20, 0
      %p62 = por %p60, %p61
      %p63 = scmp.ne.s32.totalorder %s51, %s52
      %p64 = scmp.eq.s32.totalorder %s21, 1
      %p65 = por %p63, %p64
      %p67 = scmp.ne.s32.totalorder %s52, %s66
      %p68 = scmp.eq.s32.totalorder %s21, 0
      %p69 = por %p67, %p68
      %s70 = ssub.s32 %s15, %s22
      %p71 = scmp.eq.s32.totalorder %s70, 0
      %s73 = sadd.s32 %s72, 1
      %s74 = scalar_select %p71, %s72, %s73
      %p77 = pneg %p71
      %p78 = scmp.eq.s32.totalorder %s15, 1
      %p79 = por %p77, %p78
      %p80 = scmp.ne.s32.totalorder %s72, %s75
      %p81 = scmp.eq.s32.totalorder %s15, 0
      %p82 = por %p80, %p81
      %p83 = scmp.ne.s32.totalorder %s72, %s75
      %p84 = scmp.eq.s32.totalorder %s20, 1
      %p85 = por %p83, %p84
      %p86 = scmp.ne.s32.totalorder %s75, %s76
      %p87 = scmp.eq.s32.totalorder %s20, 0
      %p88 = por %p86, %p87
      %p89 = scmp.ne.s32.totalorder %s75, %s76
      %p90 = scmp.eq.s32.totalorder %s21, 1
      %p91 = por %p89, %p90
      %p93 = scmp.ne.s32.totalorder %s76, %s92
      %p94 = scmp.eq.s32.totalorder %s21, 0
      %p95 = por %p93, %p94
      %p96 = scmp.le.s32.totalorder 1, %s15
      %p97 = scmp.lt.s32.totalorder %s15, 3
      %p98 = pnand %p96, %p97
      %p99 = pneg %p98
      // Predicated region
      $region9: #{tpu_custom_call.1} parent=5 // pred_check
        _
      $region10: #{tpu_custom_call.1} parent=5 // pred_check_branch
        %101 = sbr.rel (%p98) target = $region12
      $region11: #{tpu_custom_call.1} parent=5 // pred_region
        %s102 = ssub.s32 %s15, 1
        // Predicated region
        $region13: #{tpu_custom_call.1} parent=11 // pred_check
          %p103 = pneg %p62
        $region14: #{tpu_custom_call.1} parent=11 // pred_check_branch
          %105 = sbr.rel (%p103) target = $region16
        $region15: #{tpu_custom_call.1} parent=11 // pred_region
          %107 = vsyncadd [#allocation6], 0
          %s109 = sshll.u32 %s1, 4
          %s110 = int_to_ptr.hbm [resolvable:$true] %s109
          %s111 = sshll.u32 [#allocation5], 4
          %s112 = int_to_ptr.vmem [resolvable:$true] %s111
          %114 = dma.hbm_to_vmem [thread:$0]  %s110, 16, %s112, [#allocation6]
        $region16: #{tpu_custom_call.1} parent=11 // pred_fallthru
          _
      $region12: #{tpu_custom_call.1} parent=5 // pred_fallthru
        _
      %p115 = scmp.lt.s32.totalorder %s15, 2
      // Predicated region
      $region17: #{tpu_custom_call.1} parent=5 // pred_check
        %p116 = pneg %p115
      $region18: #{tpu_custom_call.1} parent=5 // pred_check_branch
        %118 = sbr.rel (%p116) target = $region20
      $region19: #{tpu_custom_call.1} parent=5 // pred_region
        // Predicated region
        $region21: #{tpu_custom_call.1} parent=19 // pred_check
          %p119 = pneg %p35
        $region22: #{tpu_custom_call.1} parent=19 // pred_check_branch
          %121 = sbr.rel (%p119) target = $region24
        $region23: #{tpu_custom_call.1} parent=19 // pred_region
          %s122 = sand.u32 %s25, 1
          %s123 = scalar_lea.sflag [#allocation3], %s122
          %s124 = sand.u32 %s25, 1
          %s125 = smul.addr %s124, 8
          %s126 = scalar_lea.vmem [#allocation2], %s125
          %128 = vsyncadd %s123, 0
          %s129 = smul.addr %s15, 8
          %s130 = scalar_lea.hbm %s0, %s129
          %s132 = sshll.u32 %s130, 4
          %s133 = int_to_ptr.hbm [resolvable:$true] %s132
          %s134 = sshll.u32 %s126, 4
          %s135 = int_to_ptr.vmem [resolvable:$true] %s134
          %137 = dma.hbm_to_vmem [thread:$0]  %s133, 128, %s135, %s123
        $region24: #{tpu_custom_call.1} parent=19 // pred_fallthru
          _
      $region20: #{tpu_custom_call.1} parent=5 // pred_fallthru
        _
      %p138 = scmp.le.s32.totalorder 1, %s15
      %p139 = scmp.lt.s32.totalorder %s15, 3
      %p140 = pnand %p138, %p139
      %p141 = pneg %p140
      // Predicated region
      $region25: #{tpu_custom_call.1} parent=5 // pred_check
        _
      $region26: #{tpu_custom_call.1} parent=5 // pred_check_branch
        %143 = sbr.rel (%p140) target = $region28
      $region27: #{tpu_custom_call.1} parent=5 // pred_region
        %s144 = ssub.s32 %s15, 1
        %s145 = sand.u32 %s28, 1
        %s146 = scalar_lea.sflag [#allocation3], %s145
        %s147 = sand.u32 %s28, 1
        %s148 = smul.addr %s147, 8
        %s149 = scalar_lea.vmem [#allocation2], %s148
        // Predicated region
        $region29: #{tpu_custom_call.1} parent=27 // pred_check
          %p150 = pneg %p41
        $region30: #{tpu_custom_call.1} parent=27 // pred_check_branch
          %152 = sbr.rel (%p150) target = $region32
        $region31: #{tpu_custom_call.1} parent=27 // pred_region
          %154 = dma.done %s146, 128
        $region32: #{tpu_custom_call.1} parent=27 // pred_fallthru
          _
        // Predicated region
        $region33: #{tpu_custom_call.1} parent=27 // pred_check
          %p155 = pneg %p62
        $region34: #{tpu_custom_call.1} parent=27 // pred_check_branch
          %157 = sbr.rel (%p155) target = $region36
        $region35: #{tpu_custom_call.1} parent=27 // pred_region
          %159 = dma.done [#allocation6], 16
        $region36: #{tpu_custom_call.1} parent=27 // pred_fallthru
          _
        %s160 = sand.u32 %s28, 1
        %s161 = scalar_lea.sflag [#allocation3], %s160
        %s162 = sand.u32 %s28, 1
        %s163 = smul.addr %s162, 8
        %s164 = scalar_lea.vmem [#allocation2], %s163
        %p165 = pneg %p41
        %p166 = pneg %p38
        %p167 = pneg %p62
        %p168 = pneg %p59
        %p169 = pneg %p88
        %p170 = pneg %p85
        %s171 = sand.u32 %s75, 1
        %s172 = scalar_lea.sflag [#allocation4], %s171
        %s173 = sand.u32 %s75, 1
        %s174 = smul.addr %s173, 8
        %s175 = scalar_lea.vmem [#allocation7], %s174
        %v176 = vld [vmem:[%s149] sm:$0xff]
        %v177 = vmul.f32 %v176, %v176
        %vm178 = vcmask 261120
        %v179 = vsel %vm178, %v177, 0.0
        %180 = vadd.xlane.f32.xlu0 %v179
        %v181 = vpop.xlane.xlu0 %180
        %v182 = vmul.f32 %v181, 0.03125
        %v183 = vadd.f32 %v182, 1e-05
        %v184 = vrsqrt.pop %v183
        %v185 = vmul.f32 %v184, %v183
        %v186 = vmul.f32 %v185, %v184
        %v187 = vmul.f32 0.5, %v186
        %v188 = vsub.f32 1.5, %v187
        %v189 = vmul.f32 %v184, %v188
        %vm190 = vweird.f32 %v183
        %vm191 = vweird.f32 %v184
        %vm192 = vmor %vm190, %vm191
        %v193 = vsel %vm192, %v184, %v189
        %v194 = vmul.f32 %v176, %v193
        %v195 = vld [vmem:[#allocation5] sm:$0x1]
        %v197 = vperm.slane %v195, 0
        %v199 = vmul.f32 %v197, %v194
        %200 = vst.msk [vmem:[%s175] sm:$0xff] %vm178, %v199
        %s201 = sand.u32 %s75, 1
        %s202 = scalar_lea.sflag [#allocation4], %s201
        %s203 = sand.u32 %s75, 1
        %s204 = smul.addr %s203, 8
        %s205 = scalar_lea.vmem [#allocation7], %s204
        // Predicated region
        $region37: #{tpu_custom_call.1} parent=27 // pred_check
          %p206 = pneg %p85
        $region38: #{tpu_custom_call.1} parent=27 // pred_check_branch
          %208 = sbr.rel (%p206) target = $region40
        $region39: #{tpu_custom_call.1} parent=27 // pred_region
          %210 = vsyncadd %s202, 0
          %s211 = smul.addr %s20, 8
          %s212 = scalar_lea.hbm %s2, %s211
          %s214 = sshll.u32 %s205, 4
          %s215 = int_to_ptr.vmem [resolvable:$true] %s214
          %s216 = sshll.u32 %s212, 4
          %s217 = int_to_ptr.hbm [resolvable:$true] %s216
          %219 = dma.vmem_to_hbm [thread:$0]  %s215, 128, %s217, %s202
        $region40: #{tpu_custom_call.1} parent=27 // pred_fallthru
          _
      $region28: #{tpu_custom_call.1} parent=5 // pred_fallthru
        _
      %p220 = scmp.le.s32.totalorder 2, %s15
      // Predicated region
      $region41: #{tpu_custom_call.1} parent=5 // pred_check
        %p221 = pneg %p220
      $region42: #{tpu_custom_call.1} parent=5 // pred_check_branch
        %223 = sbr.rel (%p221) target = $region44
      $region43: #{tpu_custom_call.1} parent=5 // pred_region
        %s224 = ssub.s32 %s15, 2
        // Predicated region
        $region45: #{tpu_custom_call.1} parent=43 // pred_check
          %p225 = pneg %p91
        $region46: #{tpu_custom_call.1} parent=43 // pred_check_branch
          %227 = sbr.rel (%p225) target = $region48
        $region47: #{tpu_custom_call.1} parent=43 // pred_region
          %s228 = sand.u32 %s76, 1
          %s229 = scalar_lea.sflag [#allocation4], %s228
          %s230 = sand.u32 %s76, 1
          %s231 = smul.addr %s230, 8
          %s232 = scalar_lea.vmem [#allocation7], %s231
          %234 = dma.done %s229, 128
        $region48: #{tpu_custom_call.1} parent=43 // pred_fallthru
          _
      $region44: #{tpu_custom_call.1} parent=5 // pred_fallthru
        _
    $region6: #{tpu_custom_call.1} parent=1 // loop_footer
      %s19 = sadd.s32 1, %s15
    $region7: #{tpu_custom_call.1} parent=1 // loop_footer_branch
      %14 = sbr.rel target = $region3
    $region8: #{tpu_custom_call.1} parent=1 // loop_exit
      _
    %235 = vsyncpa [#allocation3], 1
    %s236 = scalar_lea.sflag [#allocation3], 1
    %237 = vsyncpa %s236, 1
    %238 = vsyncpa [#allocation6], 1
    %239 = vsyncpa [#allocation4], 1
    %s240 = scalar_lea.sflag [#allocation4], 1
    %241 = vsyncpa %s240, 1

</llo_original>
